<compile_context>
chip_gen: v5e
topology: v5e:2x2
jax: 0.10.0
libtpu: 0.0.40
codegen_flags: <defaults>
</compile_context>

<pallas_src>
import functools

import jax
import jax.numpy as jnp
from jax.experimental import pallas as pl
from jax.experimental.pallas import tpu as pltpu

D_IN, D_HID, D_OUT = 1024, 128, 14
LANE = 128            # lane-dense padded head width
BN_EPS = 1e-5
LEAKY_SLOPE = 0.1


def _round_up(x, m):
    return ((x + m - 1) // m) * m


def _pass1_kernel(x_ref, w1_ref, b1_ref, h_ref, stat_ref, *,
                  tile_b, n_tiles, last_rows):
    """Linear(1024->128) on the MXU (bf16 in, f32 acc) + packed BN tile stats."""
    h = jnp.dot(x_ref[...].astype(jnp.bfloat16), w1_ref[...],
                preferred_element_type=jnp.float32)
    h = h + b1_ref[...]                               # (tile_b, 128) f32
    h_ref[...] = h.astype(h_ref.dtype)                # bf16 store (halves h traffic)

    sub = jax.lax.broadcasted_iota(jnp.int32, (8, D_HID), 0)

    def _stats(count, valid=None):
        # Per-tile sum and *centered* sum of squares (Chan's parallel variance).
        hv = h if valid is None else jnp.where(valid, h, 0.0)
        s = jnp.sum(hv, axis=0, keepdims=True)                    # (1, 128)
        m = s * (1.0 / count)
        d = hv - m
        if valid is not None:
            d = jnp.where(valid, d, 0.0)
        q = jnp.sum(d * d, axis=0, keepdims=True)                 # (1, 128)
        # Pack sum (sublane 0) and centered ssq (sublane 1) into one dense
        # (8, 128) block -> a single unmasked store per tile.
        return jnp.where(sub == 0, s, jnp.where(sub == 1, q, 0.0))[None]

    if last_rows == tile_b:
        # B is a multiple of tile_b: no padded rows exist (static fast path,
        # no iota/compare/select on any tile).
        stat_ref[...] = _stats(tile_b)
    else:
        i = pl.program_id(0)

        @pl.when(i != n_tiles - 1)
        def _():
            stat_ref[...] = _stats(tile_b)

        @pl.when(i == n_tiles - 1)
        def _():
            row = jax.lax.broadcasted_iota(jnp.int32, h.shape, 0)
            stat_ref[...] = _stats(last_rows, valid=row < last_rows)


def _pass2_kernel(h_ref, scale_ref, shift_ref, w2_ref, b2_ref, out_ref):
    """Folded BN affine + LeakyReLU(0.1) + padded Linear(128->128) + heads."""
    h = h_ref[...].astype(jnp.float32)                # bf16 -> f32, (tile_b, 128)
    hn = h * scale_ref[...] + shift_ref[...]          # BN folded to scale+shift
    hn = jnp.where(hn >= 0, hn, LEAKY_SLOPE * hn)     # LeakyReLU(0.1)

    c = jnp.dot(hn.astype(jnp.bfloat16), w2_ref[...],
                preferred_element_type=jnp.float32)
    c = c + b2_ref[...]                               # (tile_b, 128); cols >= 14 are 0

    col = jax.lax.broadcasted_iota(jnp.int32, c.shape, 1)
    is_disc = col < 10
    is_var = jnp.logical_and(col >= 12, col < 14)

    neg = jnp.float32(-1e30)
    logits = jnp.where(is_disc, c, neg)
    m = jnp.max(logits, axis=-1, keepdims=True)

    # Single full-width exp: softmax numerator in cols<10, exp(c) in cols 12..13.
    exp_arg = jnp.where(is_disc, c - m, jnp.where(is_var, c, neg))
    e = jnp.exp(exp_arg)

    num = jnp.where(is_disc, e, 0.0)
    denom = jnp.sum(num, axis=-1, keepdims=True)
    disc = num / denom                                # exact divide: rows sum to 1

    out = jnp.where(is_disc, disc,
                    jnp.where(col < 12, c,
                              jnp.where(is_var, e, 0.0)))
    out_ref[...] = out                                # single lane-dense 128-wide store


def qrator_forward(x, w1, b1, gamma, beta, w2, b2, *, tile_b=1024):
    """Pallas TPU forward of Qrator.

    x: (B, 1024) f32 (or bf16); w1: (1024, 128); b1/gamma/beta: (128,) or (1, 128);
    w2: (128, 14); b2: (14,) or (1, 14).
    Returns (c_discrete (B,10), c_mu (B,2), c_var (B,2)) in float32.
    """
    x = jnp.asarray(x)
    if x.dtype != jnp.bfloat16:      # keep bf16 inputs as-is; otherwise f32
        x = x.astype(jnp.float32)
    B = x.shape[0]

    # Batch tiling: multiples of 8; split the batch over >= 2 tiles when
    # possible so the "parallel" grid can shard across v7x's two TensorCores.
    half = _round_up(max(1, -(-B // 2)), 8)           # ceil(B/2) rounded up to 8
    tile_b = _round_up(max(8, min(tile_b, half)), 8)
    b_pad = _round_up(B, tile_b)
    n_tiles = b_pad // tile_b
    last_rows = B - (n_tiles - 1) * tile_b            # valid rows in the last tile
    if b_pad != B:
        x = jnp.pad(x, ((0, b_pad - B), (0, 0)))

    # Parameter prep: bf16 weights for the MXU, heads zero-padded to 128 lanes.
    w1_bf = jnp.asarray(w1, jnp.float32).astype(jnp.bfloat16)               # (1024,128)
    b1_f = jnp.asarray(b1, jnp.float32).reshape(1, D_HID)
    gamma_f = jnp.asarray(gamma, jnp.float32).reshape(1, D_HID)
    beta_f = jnp.asarray(beta, jnp.float32).reshape(1, D_HID)
    w2_p = jnp.zeros((D_HID, LANE), jnp.float32).at[:, :D_OUT].set(
        jnp.asarray(w2, jnp.float32)).astype(jnp.bfloat16)                  # (128,128)
    b2_p = jnp.zeros((1, LANE), jnp.float32).at[:, :D_OUT].set(
        jnp.asarray(b2, jnp.float32).reshape(1, D_OUT))

    cparams = pltpu.CompilerParams(
        dimension_semantics=("parallel",),
        vmem_limit_bytes=32 * 1024 * 1024)

    # ---- Pass 1: Linear(1024->128) + packed per-tile BN statistics ---------
    h, stats = pl.pallas_call(
        functools.partial(_pass1_kernel, tile_b=tile_b, n_tiles=n_tiles,
                          last_rows=last_rows),
        out_shape=(
            jax.ShapeDtypeStruct((b_pad, D_HID), jnp.bfloat16),   # h in bf16
            jax.ShapeDtypeStruct((n_tiles, 8, D_HID), jnp.float32),
        ),
        grid=(n_tiles,),
        in_specs=[
            pl.BlockSpec((tile_b, D_IN), lambda i: (i, 0)),
            pl.BlockSpec((D_IN, D_HID), lambda i: (0, 0)),
            pl.BlockSpec((1, D_HID), lambda i: (0, 0)),
        ],
        out_specs=(
            pl.BlockSpec((tile_b, D_HID), lambda i: (i, 0)),
            pl.BlockSpec((1, 8, D_HID), lambda i: (i, 0, 0)),
        ),
        compiler_params=cparams,
    )(x, w1_bf, b1_f)

    # ---- Full-batch BN stats via Chan's parallel combine (tiny reductions) --
    s = stats[:, 0, :]                                            # (n_tiles, 128)
    q = stats[:, 1, :]                                            # (n_tiles, 128)
    counts = jnp.clip(B - jnp.arange(n_tiles) * tile_b, 1, tile_b
                      ).astype(jnp.float32)[:, None]              # (n_tiles, 1)
    mean = jnp.sum(s, axis=0, keepdims=True) / B                  # (1, 128)
    tile_mean = s / counts
    var = (jnp.sum(q, axis=0, keepdims=True)
           + jnp.sum(counts * (tile_mean - mean) ** 2, axis=0, keepdims=True)) / B
    var = jnp.maximum(var, 0.0)                                   # biased variance
    scale = gamma_f * jax.lax.rsqrt(var + BN_EPS)                 # fold gamma*inv_std
    shift = beta_f - mean * scale

    # ---- Pass 2: BN affine + LeakyReLU + padded Linear(128->14) + heads ----
    out = pl.pallas_call(
        _pass2_kernel,
        out_shape=jax.ShapeDtypeStruct((b_pad, LANE), jnp.float32),
        grid=(n_tiles,),
        in_specs=[
            pl.BlockSpec((tile_b, D_HID), lambda i: (i, 0)),      # bf16 h
            pl.BlockSpec((1, D_HID), lambda i: (0, 0)),
            pl.BlockSpec((1, D_HID), lambda i: (0, 0)),
            pl.BlockSpec((D_HID, LANE), lambda i: (0, 0)),
            pl.BlockSpec((1, LANE), lambda i: (0, 0)),
        ],
        out_specs=pl.BlockSpec((tile_b, LANE), lambda i: (i, 0)),
        compiler_params=cparams,
    )(h, scale, shift, w2_p, b2_p)

    out = out[:B]
    return out[:, :10], out[:, 10:12], out[:, 12:14]


def qrator_reference(x, w1, b1, gamma, beta, w2, b2):
    h = x @ w1 + b1.reshape(1, -1)
    mean = jnp.mean(h, axis=0, keepdims=True)
    var = jnp.mean((h - mean) ** 2, axis=0, keepdims=True)        # biased
    h = (h - mean) * jax.lax.rsqrt(var + BN_EPS) * gamma.reshape(1, -1) \
        + beta.reshape(1, -1)
    h = jnp.where(h >= 0, h, LEAKY_SLOPE * h)
    c = h @ w2 + b2.reshape(1, -1)
    return (jax.nn.softmax(c[:, :10], axis=-1), c[:, 10:12], jnp.exp(c[:, 12:14]))


if __name__ == "__main__":
    # B=36 with the tile clamp gives tile_b=24, n_tiles=2, last tile 12 valid
    # rows -> exercises both the full-tile and the masked last-tile stat paths.
    B = 36

    key = jax.random.PRNGKey(0)
    kx, kw1, kb1, kg, kbt, kw2, kb2 = jax.random.split(key, 7)

    x = jax.random.normal(kx, (B, D_IN), dtype=jnp.float32)

    # Deterministic synthetic parameters (shapes from Qrator.__init__).
    w1 = jax.random.normal(kw1, (D_IN, D_HID), dtype=jnp.float32) * 0.02
    b1 = jax.random.normal(kb1, (1, D_HID), dtype=jnp.float32) * 0.01
    gamma = 1.0 + 0.1 * jax.random.normal(kg, (1, D_HID), dtype=jnp.float32)
    beta = 0.1 * jax.random.normal(kbt, (1, D_HID), dtype=jnp.float32)
    w2 = jax.random.normal(kw2, (D_HID, D_OUT), dtype=jnp.float32) * 0.05
    b2 = jax.random.normal(kb2, (1, D_OUT), dtype=jnp.float32) * 0.01

    c_disc, c_mu, c_var = qrator_forward(x, w1, b1, gamma, beta, w2, b2)
    jax.block_until_ready((c_disc, c_mu, c_var))

    # f32 reference; tolerance loosened for the bf16 MXU / bf16-h path.
    r_disc, r_mu, r_var = qrator_reference(x, w1, b1, gamma, beta, w2, b2)
    assert c_disc.shape == (B, 10) and c_mu.shape == (B, 2) and c_var.shape == (B, 2)
    assert jnp.allclose(c_disc, r_disc, atol=3e-2, rtol=3e-2)
    assert jnp.allclose(c_mu, r_mu, atol=3e-2, rtol=3e-2)
    assert jnp.allclose(c_var, r_var, atol=3e-2, rtol=3e-2)
    # Exact divide in the kernel softmax -> rows sum to 1 within f32 rounding.
    assert jnp.allclose(jnp.sum(c_disc, axis=-1), 1.0, atol=1e-3)

    print("KERNEL_OK")
</pallas_src>

<mosaic_0001>
module attributes {stable_mosaic.version = 11 : i64} {
  func.func @_pass1_kernel(%arg0: i32, %arg1: memref<24x1024xf32, #tpu.memory_space<vmem>>, %arg2: memref<1024x128xbf16, #tpu.memory_space<vmem>>, %arg3: memref<1x128xf32, #tpu.memory_space<vmem>>, %arg4: memref<24x128xbf16, #tpu.memory_space<vmem>>, %arg5: memref<1x8x128xf32, #tpu.memory_space<vmem>>) attributes {dimension_semantics = [#tpu.dimension_semantics<parallel>], iteration_bounds = array<i64: 2>, scalar_prefetch = 0 : i64, scratch_operands = 0 : i64, tpu.core_type = #tpu.core_type<tc>, window_params = [{transform_indices = @transform_0, window_bounds = array<i64: 24, 1024>}, {pipeline_mode = #tpu.pipeline_mode<synchronous>, transform_indices = @transform_1, window_bounds = array<i64: 1024, 128>}, {pipeline_mode = #tpu.pipeline_mode<synchronous>, transform_indices = @transform_2, window_bounds = array<i64: 1, 128>}, {transform_indices = @transform_3, window_bounds = array<i64: 24, 128>}, {transform_indices = @transform_4, window_bounds = array<i64: 1, 8, 128>}]} {
    %c0 = arith.constant 0 : index
    %c0_0 = arith.constant 0 : index
    %0 = vector.load %arg1[%c0, %c0_0] : memref<24x1024xf32, #tpu.memory_space<vmem>>, vector<24x1024xf32>
    %1 = arith.truncf %0 : vector<24x1024xf32> to vector<24x1024xbf16>
    %c0_1 = arith.constant 0 : index
    %c0_2 = arith.constant 0 : index
    %2 = vector.load %arg2[%c0_1, %c0_2] : memref<1024x128xbf16, #tpu.memory_space<vmem>>, vector<1024x128xbf16>
    %cst = arith.constant dense<0.000000e+00> : vector<24x128xf32>
    %3 = tpu.matmul %1, %2, %cst {dimension_numbers = #tpu.dot_dimension_numbers<[1], [0], [0], [1], [0, 0, 1, 1], [], []>} : vector<24x1024xbf16>, vector<1024x128xbf16>, vector<24x128xf32> -> vector<24x128xf32>
    %c0_3 = arith.constant 0 : index
    %c0_4 = arith.constant 0 : index
    %4 = vector.load %arg3[%c0_3, %c0_4] : memref<1x128xf32, #tpu.memory_space<vmem>>, vector<1x128xf32>
    %5 = vector.broadcast %4 : vector<1x128xf32> to vector<24x128xf32>
    %6 = arith.addf %3, %5 : vector<24x128xf32>
    %7 = arith.truncf %6 : vector<24x128xf32> to vector<24x128xbf16>
    %c0_5 = arith.constant 0 : index
    %c0_6 = arith.constant 0 : index
    %8 = vector.load %arg4[%c0_5, %c0_6] : memref<24x128xbf16, #tpu.memory_space<vmem>>, vector<24x128xbf16>
    tpu.vector_store %arg4[%c0_5, %c0_6], %7 {strides = array<i32>} : memref<24x128xbf16, #tpu.memory_space<vmem>>, vector<24x128xbf16>,
    %9 = tpu.iota {dimensions = array<i32: 0>} : vector<8x128xi32>
    %c1_i32 = arith.constant 1 : i32
    %10 = arith.cmpi ne, %arg0, %c1_i32 : i32
    %11 = arith.extui %10 : i1 to i32
    %c0_i32 = arith.constant 0 : i32
    %12 = arith.cmpi ne, %11, %c0_i32 : i32
    scf.if %12 {
      %cst_9 = arith.constant dense<0.000000e+00> : vector<128xf32>
      %16 = vector.multi_reduction <add>, %6, %cst_9 [0] : vector<24x128xf32> to vector<128xf32>
      %17 = vector.shape_cast %16 : vector<128xf32> to vector<1x128xf32>
      %cst_10 = arith.constant 0.0416666679 : f32
      %18 = vector.broadcast %cst_10 : f32 to vector<1x128xf32>
      %19 = arith.mulf %17, %18 : vector<1x128xf32>
      %20 = vector.broadcast %19 : vector<1x128xf32> to vector<24x128xf32>
      %21 = arith.subf %6, %20 : vector<24x128xf32>
      %22 = arith.mulf %21, %21 : vector<24x128xf32>
      %cst_11 = arith.constant dense<0.000000e+00> : vector<128xf32>
      %23 = vector.multi_reduction <add>, %22, %cst_11 [0] : vector<24x128xf32> to vector<128xf32>
      %24 = vector.shape_cast %23 : vector<128xf32> to vector<1x128xf32>
      %c0_i32_12 = arith.constant 0 : i32
      %25 = vector.broadcast %c0_i32_12 : i32 to vector<8x128xi32>
      %26 = arith.cmpi eq, %9, %25 : vector<8x128xi32>
      %c1_i32_13 = arith.constant 1 : i32
      %27 = vector.broadcast %c1_i32_13 : i32 to vector<8x128xi32>
      %28 = arith.cmpi eq, %9, %27 : vector<8x128xi32>
      %cst_14 = arith.constant 0.000000e+00 : f32
      %29 = vector.shape_cast %24 : vector<1x128xf32> to vector<1x128xf32>
      %30 = vector.broadcast %29 : vector<1x128xf32> to vector<8x128xf32>
      %31 = vector.broadcast %cst_14 : f32 to vector<8x128xf32>
      %32 = arith.select %28, %30, %31 : vector<8x128xi1>, vector<8x128xf32>
      %33 = vector.shape_cast %17 : vector<1x128xf32> to vector<1x128xf32>
      %34 = vector.broadcast %33 : vector<1x128xf32> to vector<8x128xf32>
      %35 = arith.select %26, %34, %32 : vector<8x128xi1>, vector<8x128xf32>
      %36 = vector.shape_cast %35 : vector<8x128xf32> to vector<1x8x128xf32>
      %c0_15 = arith.constant 0 : index
      %c0_16 = arith.constant 0 : index
      %c0_17 = arith.constant 0 : index
      %37 = vector.load %arg5[%c0_15, %c0_16, %c0_17] : memref<1x8x128xf32, #tpu.memory_space<vmem>>, vector<1x8x128xf32>
      tpu.vector_store %arg5[%c0_15, %c0_16, %c0_17], %36 {strides = array<i32>} : memref<1x8x128xf32, #tpu.memory_space<vmem>>, vector<1x8x128xf32>,
    } else {
    }
    %c1_i32_7 = arith.constant 1 : i32
    %13 = arith.cmpi eq, %arg0, %c1_i32_7 : i32
    %14 = arith.extui %13 : i1 to i32
    %c0_i32_8 = arith.constant 0 : i32
    %15 = arith.cmpi ne, %14, %c0_i32_8 : i32
    scf.if %15 {
      %16 = tpu.iota {dimensions = array<i32: 0>} : vector<24x128xi32>
      %c12_i32 = arith.constant 12 : i32
      %17 = vector.broadcast %c12_i32 : i32 to vector<24x128xi32>
      %18 = arith.cmpi slt, %16, %17 : vector<24x128xi32>
      %cst_9 = arith.constant 0.000000e+00 : f32
      %19 = vector.broadcast %cst_9 : f32 to vector<24x128xf32>
      %20 = arith.select %18, %6, %19 : vector<24x128xi1>, vector<24x128xf32>
      %cst_10 = arith.constant dense<0.000000e+00> : vector<128xf32>
      %21 = vector.multi_reduction <add>, %20, %cst_10 [0] : vector<24x128xf32> to vector<128xf32>
      %22 = vector.shape_cast %21 : vector<128xf32> to vector<1x128xf32>
      %cst_11 = arith.constant 0.0833333358 : f32
      %23 = vector.broadcast %cst_11 : f32 to vector<1x128xf32>
      %24 = arith.mulf %22, %23 : vector<1x128xf32>
      %25 = vector.broadcast %24 : vector<1x128xf32> to vector<24x128xf32>
      %26 = arith.subf %20, %25 : vector<24x128xf32>
      %cst_12 = arith.constant 0.000000e+00 : f32
      %27 = vector.broadcast %cst_12 : f32 to vector<24x128xf32>
      %28 = arith.select %18, %26, %27 : vector<24x128xi1>, vector<24x128xf32>
      %29 = arith.mulf %28, %28 : vector<24x128xf32>
      %cst_13 = arith.constant dense<0.000000e+00> : vector<128xf32>
      %30 = vector.multi_reduction <add>, %29, %cst_13 [0] : vector<24x128xf32> to vector<128xf32>
      %31 = vector.shape_cast %30 : vector<128xf32> to vector<1x128xf32>
      %c0_i32_14 = arith.constant 0 : i32
      %32 = vector.broadcast %c0_i32_14 : i32 to vector<8x128xi32>
      %33 = arith.cmpi eq, %9, %32 : vector<8x128xi32>
      %c1_i32_15 = arith.constant 1 : i32
      %34 = vector.broadcast %c1_i32_15 : i32 to vector<8x128xi32>
      %35 = arith.cmpi eq, %9, %34 : vector<8x128xi32>
      %cst_16 = arith.constant 0.000000e+00 : f32
      %36 = vector.shape_cast %31 : vector<1x128xf32> to vector<1x128xf32>
      %37 = vector.broadcast %36 : vector<1x128xf32> to vector<8x128xf32>
      %38 = vector.broadcast %cst_16 : f32 to vector<8x128xf32>
      %39 = arith.select %35, %37, %38 : vector<8x128xi1>, vector<8x128xf32>
      %40 = vector.shape_cast %22 : vector<1x128xf32> to vector<1x128xf32>
      %41 = vector.broadcast %40 : vector<1x128xf32> to vector<8x128xf32>
      %42 = arith.select %33, %41, %39 : vector<8x128xi1>, vector<8x128xf32>
      %43 = vector.shape_cast %42 : vector<8x128xf32> to vector<1x8x128xf32>
      %c0_17 = arith.constant 0 : index
      %c0_18 = arith.constant 0 : index
      %c0_19 = arith.constant 0 : index
      %44 = vector.load %arg5[%c0_17, %c0_18, %c0_19] : memref<1x8x128xf32, #tpu.memory_space<vmem>>, vector<1x8x128xf32>
      tpu.vector_store %arg5[%c0_17, %c0_18, %c0_19], %43 {strides = array<i32>} : memref<1x8x128xf32, #tpu.memory_space<vmem>>, vector<1x8x128xf32>,
    } else {
    }
    return
  }
  func.func @transform_0(%arg0: i32) -> (i32, i32) {
    %c0_i32 = arith.constant 0 : i32
    %c0_i32_0 = arith.constant 0 : i32
    return %arg0, %c0_i32 : i32, i32
  }
  func.func @transform_1(%arg0: i32) -> (i32, i32) {
    %c0_i32 = arith.constant 0 : i32
    %c0_i32_0 = arith.constant 0 : i32
    %c0_i32_1 = arith.constant 0 : i32
    return %c0_i32, %c0_i32_0 : i32, i32
  }
  func.func @transform_2(%arg0: i32) -> (i32, i32) {
    %c0_i32 = arith.constant 0 : i32
    %c0_i32_0 = arith.constant 0 : i32
    %c0_i32_1 = arith.constant 0 : i32
    return %c0_i32, %c0_i32_0 : i32, i32
  }
  func.func @transform_3(%arg0: i32) -> (i32, i32) {
    %c0_i32 = arith.constant 0 : i32
    %c0_i32_0 = arith.constant 0 : i32
    return %arg0, %c0_i32 : i32, i32
  }
  func.func @transform_4(%arg0: i32) -> (i32, i32, i32) {
    %c0_i32 = arith.constant 0 : i32
    %c0_i32_0 = arith.constant 0 : i32
    %c0_i32_1 = arith.constant 0 : i32
    return %arg0, %c0_i32, %c0_i32_0 : i32, i32, i32
  }
}

</mosaic_0001>

<llo_original>
// kernel: tpu_custom_call.1
$region0: #{tpu_custom_call.1}
  #allocation0 [shape = 'u32[]', space=smem, size = 0x4, offset = 0x4, fixed_abs, tag = 'smem constant byte address 0x4 - core index']
  #allocation1 [shape = 'u32[72,128]{1,0:T(1,128)}', space=vmem, size = 0x9000, scoped, tag = 'internal scratch']
  %s0 = inlined_call_operand.hbm [shape: f32[48,1024], index: 0, kind: input, shape index: {}]
  %s1 = inlined_call_operand.hbm [shape: bf16[1024,128], index: 1, kind: input, shape index: {}]
  %s2 = inlined_call_operand.vmem [shape: f32[1,128], index: 2, kind: input, shape index: {}]
  %s3 = inlined_call_operand.hbm [shape: bf16[48,128], index: 3, kind: output, shape index: {0}]
  %s4 = inlined_call_operand.hbm [shape: f32[2,8,128], index: 4, kind: output, shape index: {1}]
  %5 = xla_tuple %s3, %s4
  %s6 = sld [smem:[#allocation0]]
  $region69: #{tpu_custom_call.1} parent=0
    _
  %s8 = ssub.s32 1, %s6
  %s9 = scalar_select 0, %s8, %s6
  $region1: #{tpu_custom_call.1} parent=0
    #allocation2 [shape = 'u8[196608]{0}', space=vmem, size = 0x30000, scoped, tag = 'input window, operand 0']
    #allocation3 [shape = 's32[2]{0}', space=sflag, size = 0x8, scoped, tag = 'scoped memory for tpu_custom_call.1']
    #allocation4 [shape = 's32[2]{0}', space=sflag, size = 0x8, scoped, tag = 'scoped memory for tpu_custom_call.1']
    #allocation5 [shape = 'u8[262144]{0}', space=vmem, size = 0x40000, scoped, tag = 'input window, operand 1, single buffered']
    #allocation6 [shape = 's32[1]{0}', space=sflag, size = 0x4, scoped, tag = 'scoped memory for tpu_custom_call.1']
    #allocation7 [shape = 'u8[12288]{0}', space=vmem, size = 0x3000, scoped, tag = 'output window, operand 0']
    #allocation8 [shape = 'u8[8192]{0}', space=vmem, size = 0x2000, scoped, tag = 'output window, operand 1']
    #allocation9 [shape = 's32[2]{0}', space=sflag, size = 0x8, scoped, tag = 'scoped memory for tpu_custom_call.1']
    %10 = vsyncpa [#allocation3], 0
    %s11 = scalar_lea.sflag [#allocation3], 1
    %12 = vsyncpa %s11, 0
    %13 = vsyncpa [#allocation6], 0
    %14 = vsyncpa [#allocation4], 0
    %s15 = scalar_lea.sflag [#allocation4], 1
    %16 = vsyncpa %s15, 0
    %17 = vsyncpa [#allocation9], 0
    %s18 = scalar_lea.sflag [#allocation9], 1
    %19 = vsyncpa %s18, 0
    loop: start=0, step=1, limit=4
    $region2: #{tpu_custom_call.1} parent=1 // loop_pre_header
      _
    $region3: #{tpu_custom_call.1} parent=1 // loop_header
      %s21 = sphi 0, %s25
      %p22 = scmp.ge.s32.totalorder %s21, 4
      %s31 = sphi 0, %s33
      %s34 = sphi 0, %s31
      %s35 = sphi 0, %s34
      %s51 = sphi 0, %s35
      %s55 = sphi 0, %s55
      %s57 = sphi 0, %s55
      %s58 = sphi 0, %s57
      %s72 = sphi 0, %s58
      %s76 = sphi 0, %s76
      %s78 = sphi 0, %s76
      %s79 = sphi 0, %s78
      %s93 = sphi 0, %s79
      %s99 = sphi 0, %s101
      %s102 = sphi 0, %s99
      %s103 = sphi 0, %s102
      %s119 = sphi 0, %s103
      %s125 = sphi 0, %s127
      %s128 = sphi 0, %s125
      %s129 = sphi 0, %s128
      %s145 = sphi 0, %s129
    $region4: #{tpu_custom_call.1} parent=1 // loop_header_branch
      %24 = sbr.rel (%p22) target = $region8
    $region5: #{tpu_custom_call.1} parent=1 // loop_body
      %s26 = ssub.s32 %s21, 1
      %s27 = ssub.s32 %s21, 2
      %s28 = sadd.s32 %s21, 1
      %s29 = ssub.s32 %s21, %s28
      %p30 = scmp.eq.s32.totalorder %s29, 0
      %s32 = sadd.s32 %s31, 1
      %s33 = scalar_select %p30, %s31, %s32
      %p36 = pneg %p30
      %p37 = scmp.eq.s32.totalorder %s21, 1
      %p38 = por %p36, %p37
      %p39 = scmp.ne.s32.totalorder %s31, %s34
      %p40 = scmp.eq.s32.totalorder %s21, 0
      %p41 = por %p39, %p40
      %p42 = scmp.ne.s32.totalorder %s31, %s34
      %p43 = scmp.eq.s32.totalorder %s26, 1
      %p44 = por %p42, %p43
      %p45 = scmp.ne.s32.totalorder %s34, %s35
      %p46 = scmp.eq.s32.totalorder %s26, 0
      %p47 = por %p45, %p46
      %p48 = scmp.ne.s32.totalorder %s34, %s35
      %p49 = scmp.eq.s32.totalorder %s27, 1
      %p50 = por %p48, %p49
      %p52 = scmp.ne.s32.totalorder %s35, %s51
      %p53 = scmp.eq.s32.totalorder %s27, 0
      %p54 = por %p52, %p53
      %s56 = sadd.s32 %s55, 1
      %p59 = scmp.eq.s32.totalorder %s21, 1
      %p60 = scmp.ne.s32.totalorder %s55, %s57
      %p61 = scmp.eq.s32.totalorder %s21, 0
      %p62 = por %p60, %p61
      %p63 = scmp.ne.s32.totalorder %s55, %s57
      %p64 = scmp.eq.s32.totalorder %s26, 1
      %p65 = por %p63, %p64
      %p66 = scmp.ne.s32.totalorder %s57, %s58
      %p67 = scmp.eq.s32.totalorder %s26, 0
      %p68 = por %p66, %p67
      %p69 = scmp.ne.s32.totalorder %s57, %s58
      %p70 = scmp.eq.s32.totalorder %s27, 1
      %p71 = por %p69, %p70
      %p73 = scmp.ne.s32.totalorder %s58, %s72
      %p74 = scmp.eq.s32.totalorder %s27, 0
      %p75 = por %p73, %p74
      %s77 = sadd.s32 %s76, 1
      %p80 = scmp.eq.s32.totalorder %s21, 1
      %p81 = scmp.ne.s32.totalorder %s76, %s78
      %p82 = scmp.eq.s32.totalorder %s21, 0
      %p83 = por %p81, %p82
      %p84 = scmp.ne.s32.totalorder %s76, %s78
      %p85 = scmp.eq.s32.totalorder %s26, 1
      %p86 = por %p84, %p85
      %p87 = scmp.ne.s32.totalorder %s78, %s79
      %p88 = scmp.eq.s32.totalorder %s26, 0
      %p89 = por %p87, %p88
      %p90 = scmp.ne.s32.totalorder %s78, %s79
      %p91 = scmp.eq.s32.totalorder %s27, 1
      %p92 = por %p90, %p91
      %p94 = scmp.ne.s32.totalorder %s79, %s93
      %p95 = scmp.eq.s32.totalorder %s27, 0
      %p96 = por %p94, %p95
      %s97 = ssub.s32 %s21, %s28
      %p98 = scmp.eq.s32.totalorder %s97, 0
      %s100 = sadd.s32 %s99, 1
      %s101 = scalar_select %p98, %s99, %s100
      %p104 = pneg %p98
      %p105 = scmp.eq.s32.totalorder %s21, 1
      %p106 = por %p104, %p105
      %p107 = scmp.ne.s32.totalorder %s99, %s102
      %p108 = scmp.eq.s32.totalorder %s21, 0
      %p109 = por %p107, %p108
      %p110 = scmp.ne.s32.totalorder %s99, %s102
      %p111 = scmp.eq.s32.totalorder %s26, 1
      %p112 = por %p110, %p111
      %p113 = scmp.ne.s32.totalorder %s102, %s103
      %p114 = scmp.eq.s32.totalorder %s26, 0
      %p115 = por %p113, %p114
      %p116 = scmp.ne.s32.totalorder %s102, %s103
      %p117 = scmp.eq.s32.totalorder %s27, 1
      %p118 = por %p116, %p117
      %p120 = scmp.ne.s32.totalorder %s103, %s119
      %p121 = scmp.eq.s32.totalorder %s27, 0
      %p122 = por %p120, %p121
      %s123 = ssub.s32 %s21, %s28
      %p124 = scmp.eq.s32.totalorder %s123, 0
      %s126 = sadd.s32 %s125, 1
      %s127 = scalar_select %p124, %s125, %s126
      %p130 = pneg %p124
      %p131 = scmp.eq.s32.totalorder %s21, 1
      %p132 = por %p130, %p131
      %p133 = scmp.ne.s32.totalorder %s125, %s128
      %p134 = scmp.eq.s32.totalorder %s21, 0
      %p135 = por %p133, %p134
      %p136 = scmp.ne.s32.totalorder %s125, %s128
      %p137 = scmp.eq.s32.totalorder %s26, 1
      %p138 = por %p136, %p137
      %p139 = scmp.ne.s32.totalorder %s128, %s129
      %p140 = scmp.eq.s32.totalorder %s26, 0
      %p141 = por %p139, %p140
      %p142 = scmp.ne.s32.totalorder %s128, %s129
      %p143 = scmp.eq.s32.totalorder %s27, 1
      %p144 = por %p142, %p143
      %p146 = scmp.ne.s32.totalorder %s129, %s145
      %p147 = scmp.eq.s32.totalorder %s27, 0
      %p148 = por %p146, %p147
      %p149 = scmp.le.s32.totalorder 1, %s21
      %p150 = scmp.lt.s32.totalorder %s21, 3
      %p151 = pnand %p149, %p150
      %p152 = pneg %p151
      // Predicated region
      $region9: #{tpu_custom_call.1} parent=5 // pred_check
        _
      $region10: #{tpu_custom_call.1} parent=5 // pred_check_branch
        %154 = sbr.rel (%p151) target = $region12
      $region11: #{tpu_custom_call.1} parent=5 // pred_region
        %s155 = ssub.s32 %s21, 1
        // Predicated region
        $region13: #{tpu_custom_call.1} parent=11 // pred_check
          %p156 = pneg %p68
        $region14: #{tpu_custom_call.1} parent=11 // pred_check_branch
          %158 = sbr.rel (%p156) target = $region16
        $region15: #{tpu_custom_call.1} parent=11 // pred_region
          %160 = vsyncadd [#allocation6], 0
          %s161 = sshll.u32 %s1, 4
          %s162 = int_to_ptr.hbm [resolvable:$true] %s161
          %s163 = sshll.u32 [#allocation5], 4
          %s164 = int_to_ptr.vmem [resolvable:$true] %s163
          %169 = dma.hbm_to_vmem [thread:$0]  %s162, 8192, %s164, [#allocation6], 64, 64, 4
        $region16: #{tpu_custom_call.1} parent=11 // pred_fallthru
          _
        // Predicated region
        $region17: #{tpu_custom_call.1} parent=11 // pred_check
          %p170 = pneg %p89
        $region18: #{tpu_custom_call.1} parent=11 // pred_check_branch
          %172 = sbr.rel (%p170) target = $region20
        $region19: #{tpu_custom_call.1} parent=11 // pred_region
          _
        $region20: #{tpu_custom_call.1} parent=11 // pred_fallthru
          _
      $region12: #{tpu_custom_call.1} parent=5 // pred_fallthru
        _
      %p173 = scmp.lt.s32.totalorder %s21, 2
      // Predicated region
      $region21: #{tpu_custom_call.1} parent=5 // pred_check
        %p174 = pneg %p173
      $region22: #{tpu_custom_call.1} parent=5 // pred_check_branch
        %176 = sbr.rel (%p174) target = $region24
      $region23: #{tpu_custom_call.1} parent=5 // pred_region
        // Predicated region
        $region25: #{tpu_custom_call.1} parent=23 // pred_check
          %p177 = pneg %p41
        $region26: #{tpu_custom_call.1} parent=23 // pred_check_branch
          %179 = sbr.rel (%p177) target = $region28
        $region27: #{tpu_custom_call.1} parent=23 // pred_region
          %s180 = sand.u32 %s31, 1
          %s181 = scalar_lea.sflag [#allocation3], %s180
          %s182 = sand.u32 %s31, 1
          %s183 = smul.addr %s182, 192
          %s184 = scalar_lea.vmem [#allocation2], %s183
          %s185 = smul.u32 3, %s21
          %187 = vsyncadd %s181, 0
          %s188 = smul.addr %s185, 8
          %s189 = smul.addr %s188, 8
          %s190 = scalar_lea.hbm %s0, %s189
          %s191 = sshll.u32 %s190, 4
          %s192 = int_to_ptr.hbm [resolvable:$true] %s191
          %s193 = sshll.u32 %s184, 4
          %s194 = int_to_ptr.vmem [resolvable:$true] %s193
          %199 = dma.hbm_to_vmem [thread:$0]  %s192, 3072, %s194, %s181, 1024, 1024, 64
        $region28: #{tpu_custom_call.1} parent=23 // pred_fallthru
          _
      $region24: #{tpu_custom_call.1} parent=5 // pred_fallthru
        _
      %p200 = scmp.le.s32.totalorder 1, %s21
      %p201 = scmp.lt.s32.totalorder %s21, 3
      %p202 = pnand %p200, %p201
      %p203 = pneg %p202
      // Predicated region
      $region29: #{tpu_custom_call.1} parent=5 // pred_check
        _
      $region30: #{tpu_custom_call.1} parent=5 // pred_check_branch
        %205 = sbr.rel (%p202) target = $region32
      $region31: #{tpu_custom_call.1} parent=5 // pred_region
        %s206 = ssub.s32 %s21, 1
        %s207 = sand.u32 %s34, 1
        %s208 = scalar_lea.sflag [#allocation3], %s207
        %s209 = sand.u32 %s34, 1
        %s210 = smul.addr %s209, 192
        %s211 = scalar_lea.vmem [#allocation2], %s210
        // Predicated region
        $region33: #{tpu_custom_call.1} parent=31 // pred_check
          %p212 = pneg %p47
        $region34: #{tpu_custom_call.1} parent=31 // pred_check_branch
          %214 = sbr.rel (%p212) target = $region36
        $region35: #{tpu_custom_call.1} parent=31 // pred_region
          %216 = dma.done %s208, 3072
        $region36: #{tpu_custom_call.1} parent=31 // pred_fallthru
          _
        // Predicated region
        $region37: #{tpu_custom_call.1} parent=31 // pred_check
          %p217 = pneg %p68
        $region38: #{tpu_custom_call.1} parent=31 // pred_check_branch
          %219 = sbr.rel (%p217) target = $region40
        $region39: #{tpu_custom_call.1} parent=31 // pred_region
          %221 = dma.done [#allocation6], 8192
        $region40: #{tpu_custom_call.1} parent=31 // pred_fallthru
          _
        %s222 = sand.u32 %s34, 1
        %s223 = scalar_lea.sflag [#allocation3], %s222
        %s224 = sand.u32 %s34, 1
        %s225 = smul.addr %s224, 192
        %s226 = scalar_lea.vmem [#allocation2], %s225
        %p227 = pneg %p47
        %p228 = pneg %p44
        %p229 = pneg %p68
        %p230 = pneg %p65
        %p231 = pneg %p89
        %p232 = pneg %p86
        %p233 = pneg %p115
        %p234 = pneg %p112
        %s235 = sand.u32 %s102, 1
        %s236 = scalar_lea.sflag [#allocation4], %s235
        %s237 = sand.u32 %s102, 1
        %s238 = smul.addr %s237, 12
        %s239 = scalar_lea.vmem [#allocation7], %s238
        %p240 = pneg %p141
        %p241 = pneg %p138
        %s242 = sand.u32 %s128, 1
        %s243 = scalar_lea.sflag [#allocation9], %s242
        %s244 = sand.u32 %s128, 1
        %s245 = smul.addr %s244, 8
        %s246 = scalar_lea.vmem [#allocation8], %s245
        %s247 = smul.u32 3, %s26
        %s248 = smul.u32 3, %s26
        %v249 = vld [vmem:[%s211] sm:$0xff]
        %v250 = vld [vmem:[%s211 + $0x8] sm:$0xff]
        %v251 = vld [vmem:[%s211 + $0x10] sm:$0xff]
        %v252 = vld [vmem:[%s211 + $0x18] sm:$0xff]
        %v253 = vld [vmem:[%s211 + $0x20] sm:$0xff]
        %v254 = vld [vmem:[%s211 + $0x28] sm:$0xff]
        %v255 = vld [vmem:[%s211 + $0x30] sm:$0xff]
        %v256 = vld [vmem:[%s211 + $0x38] sm:$0xff]
        %v257 = vld [vmem:[%s211 + $0x40] sm:$0xff]
        %v258 = vld [vmem:[%s211 + $0x48] sm:$0xff]
        %v259 = vld [vmem:[%s211 + $0x50] sm:$0xff]
        %v260 = vld [vmem:[%s211 + $0x58] sm:$0xff]
        %v261 = vld [vmem:[%s211 + $0x60] sm:$0xff]
        %v262 = vld [vmem:[%s211 + $0x68] sm:$0xff]
        %v263 = vld [vmem:[%s211 + $0x70] sm:$0xff]
        %v264 = vld [vmem:[%s211 + $0x78] sm:$0xff]
        %v265 = vld [vmem:[%s211 + $0x80] sm:$0xff]
        %v266 = vld [vmem:[%s211 + $0x88] sm:$0xff]
        %v267 = vld [vmem:[%s211 + $0x90] sm:$0xff]
        %v268 = vld [vmem:[%s211 + $0x98] sm:$0xff]
        %v269 = vld [vmem:[%s211 + $0xa0] sm:$0xff]
        %v270 = vld [vmem:[%s211 + $0xa8] sm:$0xff]
        %v271 = vld [vmem:[%s211 + $0xb0] sm:$0xff]
        %v272 = vld [vmem:[%s211 + $0xb8] sm:$0xff]
        %v273 = vpack.c.bf16 %v257, %v249
        %v274 = vpack.c.bf16 %v258, %v250
        %v275 = vpack.c.bf16 %v259, %v251
        %v276 = vpack.c.bf16 %v260, %v252
        %v277 = vpack.c.bf16 %v261, %v253
        %v278 = vpack.c.bf16 %v262, %v254
        %v279 = vpack.c.bf16 %v263, %v255
        %v280 = vpack.c.bf16 %v264, %v256
        %v281 = vpack.c.bf16 %v265, %v265
        %v282 = vpack.c.bf16 %v266, %v266
        %v283 = vpack.c.bf16 %v267, %v267
        %v284 = vpack.c.bf16 %v268, %v268
        %v285 = vpack.c.bf16 %v269, %v269
        %v286 = vpack.c.bf16 %v270, %v270
        %v287 = vpack.c.bf16 %v271, %v271
        %v288 = vpack.c.bf16 %v272, %v272
        %v289 = vld [vmem:[#allocation5] sm:$0xf]
        %v290 = vld [vmem:[#allocation5 + $0x4] sm:$0xf]
        %v291 = vld [vmem:[#allocation5 + $0x8] sm:$0xf]
        %v292 = vld [vmem:[#allocation5 + $0xc] sm:$0xf]
        %v293 = vld [vmem:[#allocation5 + $0x10] sm:$0xf]
        %v294 = vld [vmem:[#allocation5 + $0x14] sm:$0xf]
        %v295 = vld [vmem:[#allocation5 + $0x18] sm:$0xf]
        %v296 = vld [vmem:[#allocation5 + $0x1c] sm:$0xf]
        %v297 = vld [vmem:[#allocation5 + $0x20] sm:$0xf]
        %v298 = vld [vmem:[#allocation5 + $0x24] sm:$0xf]
        %v299 = vld [vmem:[#allocation5 + $0x28] sm:$0xf]
        %v300 = vld [vmem:[#allocation5 + $0x2c] sm:$0xf]
        %v301 = vld [vmem:[#allocation5 + $0x30] sm:$0xf]
        %v302 = vld [vmem:[#allocation5 + $0x34] sm:$0xf]
        %v303 = vld [vmem:[#allocation5 + $0x38] sm:$0xf]
        %v304 = vld [vmem:[#allocation5 + $0x3c] sm:$0xf]
        %v305 = vld [vmem:[#allocation5 + $0x40] sm:$0xf]
        %v306 = vld [vmem:[#allocation5 + $0x44] sm:$0xf]
        %v307 = vld [vmem:[#allocation5 + $0x48] sm:$0xf]
        %v308 = vld [vmem:[#allocation5 + $0x4c] sm:$0xf]
        %v309 = vld [vmem:[#allocation5 + $0x50] sm:$0xf]
        %v310 = vld [vmem:[#allocation5 + $0x54] sm:$0xf]
        %v311 = vld [vmem:[#allocation5 + $0x58] sm:$0xf]
        %v312 = vld [vmem:[#allocation5 + $0x5c] sm:$0xf]
        %v313 = vld [vmem:[#allocation5 + $0x60] sm:$0xf]
        %v314 = vld [vmem:[#allocation5 + $0x64] sm:$0xf]
        %v315 = vld [vmem:[#allocation5 + $0x68] sm:$0xf]
        %v316 = vld [vmem:[#allocation5 + $0x6c] sm:$0xf]
        %v317 = vld [vmem:[#allocation5 + $0x70] sm:$0xf]
        %v318 = vld [vmem:[#allocation5 + $0x74] sm:$0xf]
        %v319 = vld [vmem:[#allocation5 + $0x78] sm:$0xf]
        %v320 = vld [vmem:[#allocation5 + $0x7c] sm:$0xf]
        %v321 = vld [vmem:[#allocation5 + $0x80] sm:$0xf]
        %v322 = vld [vmem:[#allocation5 + $0x84] sm:$0xf]
        %v323 = vld [vmem:[#allocation5 + $0x88] sm:$0xf]
        %v324 = vld [vmem:[#allocation5 + $0x8c] sm:$0xf]
        %v325 = vld [vmem:[#allocation5 + $0x90] sm:$0xf]
        %v326 = vld [vmem:[#allocation5 + $0x94] sm:$0xf]
        %v327 = vld [vmem:[#allocation5 + $0x98] sm:$0xf]
        %v328 = vld [vmem:[#allocation5 + $0x9c] sm:$0xf]
        %v329 = vld [vmem:[#allocation5 + $0xa0] sm:$0xf]
        %v330 = vld [vmem:[#allocation5 + $0xa4] sm:$0xf]
        %v331 = vld [vmem:[#allocation5 + $0xa8] sm:$0xf]
        %v332 = vld [vmem:[#allocation5 + $0xac] sm:$0xf]
        %v333 = vld [vmem:[#allocation5 + $0xb0] sm:$0xf]
        %v334 = vld [vmem:[#allocation5 + $0xb4] sm:$0xf]
        %v335 = vld [vmem:[#allocation5 + $0xb8] sm:$0xf]
        %v336 = vld [vmem:[#allocation5 + $0xbc] sm:$0xf]
        %v337 = vld [vmem:[#allocation5 + $0xc0] sm:$0xf]
        %v338 = vld [vmem:[#allocation5 + $0xc4] sm:$0xf]
        %v339 = vld [vmem:[#allocation5 + $0xc8] sm:$0xf]
        %v340 = vld [vmem:[#allocation5 + $0xcc] sm:$0xf]
        %v341 = vld [vmem:[#allocation5 + $0xd0] sm:$0xf]
        %v342 = vld [vmem:[#allocation5 + $0xd4] sm:$0xf]
        %v343 = vld [vmem:[#allocation5 + $0xd8] sm:$0xf]
        %v344 = vld [vmem:[#allocation5 + $0xdc] sm:$0xf]
        %v345 = vld [vmem:[#allocation5 + $0xe0] sm:$0xf]
        %v346 = vld [vmem:[#allocation5 + $0xe4] sm:$0xf]
        %v347 = vld [vmem:[#allocation5 + $0xe8] sm:$0xf]
        %v348 = vld [vmem:[#allocation5 + $0xec] sm:$0xf]
        %v349 = vld [vmem:[#allocation5 + $0xf0] sm:$0xf]
        %v350 = vld [vmem:[#allocation5 + $0xf4] sm:$0xf]
        %v351 = vld [vmem:[#allocation5 + $0xf8] sm:$0xf]
        %v352 = vld [vmem:[#allocation5 + $0xfc] sm:$0xf]
        %v353 = vld [vmem:[#allocation5 + $0x100] sm:$0xf]
        %v354 = vld [vmem:[#allocation5 + $0x104] sm:$0xf]
        %v355 = vld [vmem:[#allocation5 + $0x108] sm:$0xf]
        %v356 = vld [vmem:[#allocation5 + $0x10c] sm:$0xf]
        %v357 = vld [vmem:[#allocation5 + $0x110] sm:$0xf]
        %v358 = vld [vmem:[#allocation5 + $0x114] sm:$0xf]
        %v359 = vld [vmem:[#allocation5 + $0x118] sm:$0xf]
        %v360 = vld [vmem:[#allocation5 + $0x11c] sm:$0xf]
        %v361 = vld [vmem:[#allocation5 + $0x120] sm:$0xf]
        %v362 = vld [vmem:[#allocation5 + $0x124] sm:$0xf]
        %v363 = vld [vmem:[#allocation5 + $0x128] sm:$0xf]
        %v364 = vld [vmem:[#allocation5 + $0x12c] sm:$0xf]
        %v365 = vld [vmem:[#allocation5 + $0x130] sm:$0xf]
        %v366 = vld [vmem:[#allocation5 + $0x134] sm:$0xf]
        %v367 = vld [vmem:[#allocation5 + $0x138] sm:$0xf]
        %v368 = vld [vmem:[#allocation5 + $0x13c] sm:$0xf]
        %v369 = vld [vmem:[#allocation5 + $0x140] sm:$0xf]
        %v370 = vld [vmem:[#allocation5 + $0x144] sm:$0xf]
        %v371 = vld [vmem:[#allocation5 + $0x148] sm:$0xf]
        %v372 = vld [vmem:[#allocation5 + $0x14c] sm:$0xf]
        %v373 = vld [vmem:[#allocation5 + $0x150] sm:$0xf]
        %v374 = vld [vmem:[#allocation5 + $0x154] sm:$0xf]
        %v375 = vld [vmem:[#allocation5 + $0x158] sm:$0xf]
        %v376 = vld [vmem:[#allocation5 + $0x15c] sm:$0xf]
        %v377 = vld [vmem:[#allocation5 + $0x160] sm:$0xf]
        %v378 = vld [vmem:[#allocation5 + $0x164] sm:$0xf]
        %v379 = vld [vmem:[#allocation5 + $0x168] sm:$0xf]
        %v380 = vld [vmem:[#allocation5 + $0x16c] sm:$0xf]
        %v381 = vld [vmem:[#allocation5 + $0x170] sm:$0xf]
        %v382 = vld [vmem:[#allocation5 + $0x174] sm:$0xf]
        %v383 = vld [vmem:[#allocation5 + $0x178] sm:$0xf]
        %v384 = vld [vmem:[#allocation5 + $0x17c] sm:$0xf]
        %v385 = vld [vmem:[#allocation5 + $0x180] sm:$0xf]
        %v386 = vld [vmem:[#allocation5 + $0x184] sm:$0xf]
        %v387 = vld [vmem:[#allocation5 + $0x188] sm:$0xf]
        %v388 = vld [vmem:[#allocation5 + $0x18c] sm:$0xf]
        %v389 = vld [vmem:[#allocation5 + $0x190] sm:$0xf]
        %v390 = vld [vmem:[#allocation5 + $0x194] sm:$0xf]
        %v391 = vld [vmem:[#allocation5 + $0x198] sm:$0xf]
        %v392 = vld [vmem:[#allocation5 + $0x19c] sm:$0xf]
        %v393 = vld [vmem:[#allocation5 + $0x1a0] sm:$0xf]
        %v394 = vld [vmem:[#allocation5 + $0x1a4] sm:$0xf]
        %v395 = vld [vmem:[#allocation5 + $0x1a8] sm:$0xf]
        %v396 = vld [vmem:[#allocation5 + $0x1ac] sm:$0xf]
        %v397 = vld [vmem:[#allocation5 + $0x1b0] sm:$0xf]
        %v398 = vld [vmem:[#allocation5 + $0x1b4] sm:$0xf]
        %v399 = vld [vmem:[#allocation5 + $0x1b8] sm:$0xf]
        %v400 = vld [vmem:[#allocation5 + $0x1bc] sm:$0xf]
        %v401 = vld [vmem:[#allocation5 + $0x1c0] sm:$0xf]
        %v402 = vld [vmem:[#allocation5 + $0x1c4] sm:$0xf]
        %v403 = vld [vmem:[#allocation5 + $0x1c8] sm:$0xf]
        %v404 = vld [vmem:[#allocation5 + $0x1cc] sm:$0xf]
        %v405 = vld [vmem:[#allocation5 + $0x1d0] sm:$0xf]
        %v406 = vld [vmem:[#allocation5 + $0x1d4] sm:$0xf]
        %v407 = vld [vmem:[#allocation5 + $0x1d8] sm:$0xf]
        %v408 = vld [vmem:[#allocation5 + $0x1dc] sm:$0xf]
        %v409 = vld [vmem:[#allocation5 + $0x1e0] sm:$0xf]
        %v410 = vld [vmem:[#allocation5 + $0x1e4] sm:$0xf]
        %v411 = vld [vmem:[#allocation5 + $0x1e8] sm:$0xf]
        %v412 = vld [vmem:[#allocation5 + $0x1ec] sm:$0xf]
        %v413 = vld [vmem:[#allocation5 + $0x1f0] sm:$0xf]
        %v414 = vld [vmem:[#allocation5 + $0x1f4] sm:$0xf]
        %v415 = vld [vmem:[#allocation5 + $0x1f8] sm:$0xf]
        %v416 = vld [vmem:[#allocation5 + $0x1fc] sm:$0xf]
        %v417 = vld [vmem:[%s2] sm:$0x1]
        %v419 = vperm.slane %v417, 0
        %v549 = vunpack.c.l.b16 %v289
        %v550 = vunpack.c.l.b16 %v290
        %v551 = vunpack.c.l.b16 %v291
        %v552 = vunpack.c.l.b16 %v292
        %v553 = vunpack.c.l.b16 %v293
        %v554 = vunpack.c.l.b16 %v294
        %v555 = vunpack.c.l.b16 %v295
        %v556 = vunpack.c.l.b16 %v296
        %v557 = vunpack.c.l.b16 %v297
        %v558 = vunpack.c.l.b16 %v298
        %v559 = vunpack.c.l.b16 %v299
        %v560 = vunpack.c.l.b16 %v300
        %v561 = vunpack.c.l.b16 %v301
        %v562 = vunpack.c.l.b16 %v302
        %v563 = vunpack.c.l.b16 %v303
        %v564 = vunpack.c.l.b16 %v304
        %v565 = vunpack.c.l.b16 %v305
        %v566 = vunpack.c.l.b16 %v306
        %v567 = vunpack.c.l.b16 %v307
        %v568 = vunpack.c.l.b16 %v308
        %v569 = vunpack.c.l.b16 %v309
        %v570 = vunpack.c.l.b16 %v310
        %v571 = vunpack.c.l.b16 %v311
        %v572 = vunpack.c.l.b16 %v312
        %v573 = vunpack.c.l.b16 %v313
        %v574 = vunpack.c.l.b16 %v314
        %v575 = vunpack.c.l.b16 %v315
        %v576 = vunpack.c.l.b16 %v316
        %v577 = vunpack.c.l.b16 %v317
        %v578 = vunpack.c.l.b16 %v318
        %v579 = vunpack.c.l.b16 %v319
        %v580 = vunpack.c.l.b16 %v320
        %v581 = vunpack.c.l.b16 %v321
        %v582 = vunpack.c.l.b16 %v322
        %v583 = vunpack.c.l.b16 %v323
        %v584 = vunpack.c.l.b16 %v324
        %v585 = vunpack.c.l.b16 %v325
        %v586 = vunpack.c.l.b16 %v326
        %v587 = vunpack.c.l.b16 %v327
        %v588 = vunpack.c.l.b16 %v328
        %v589 = vunpack.c.l.b16 %v329
        %v590 = vunpack.c.l.b16 %v330
        %v591 = vunpack.c.l.b16 %v331
        %v592 = vunpack.c.l.b16 %v332
        %v593 = vunpack.c.l.b16 %v333
        %v594 = vunpack.c.l.b16 %v334
        %v595 = vunpack.c.l.b16 %v335
        %v596 = vunpack.c.l.b16 %v336
        %v597 = vunpack.c.l.b16 %v337
        %v598 = vunpack.c.l.b16 %v338
        %v599 = vunpack.c.l.b16 %v339
        %v600 = vunpack.c.l.b16 %v340
        %v601 = vunpack.c.l.b16 %v341
        %v602 = vunpack.c.l.b16 %v342
        %v603 = vunpack.c.l.b16 %v343
        %v604 = vunpack.c.l.b16 %v344
        %v605 = vunpack.c.l.b16 %v345
        %v606 = vunpack.c.l.b16 %v346
        %v607 = vunpack.c.l.b16 %v347
        %v608 = vunpack.c.l.b16 %v348
        %v609 = vunpack.c.l.b16 %v349
        %v610 = vunpack.c.l.b16 %v350
        %v611 = vunpack.c.l.b16 %v351
        %v612 = vunpack.c.l.b16 %v352
        %v613 = vunpack.c.l.b16 %v353
        %v614 = vunpack.c.l.b16 %v354
        %v615 = vunpack.c.l.b16 %v355
        %v616 = vunpack.c.l.b16 %v356
        %v617 = vunpack.c.l.b16 %v357
        %v618 = vunpack.c.l.b16 %v358
        %v619 = vunpack.c.l.b16 %v359
        %v620 = vunpack.c.l.b16 %v360
        %v621 = vunpack.c.l.b16 %v361
        %v622 = vunpack.c.l.b16 %v362
        %v623 = vunpack.c.l.b16 %v363
        %v624 = vunpack.c.l.b16 %v364
        %v625 = vunpack.c.l.b16 %v365
        %v626 = vunpack.c.l.b16 %v366
        %v627 = vunpack.c.l.b16 %v367
        %v628 = vunpack.c.l.b16 %v368
        %v629 = vunpack.c.l.b16 %v369
        %v630 = vunpack.c.l.b16 %v370
        %v631 = vunpack.c.l.b16 %v371
        %v632 = vunpack.c.l.b16 %v372
        %v633 = vunpack.c.l.b16 %v373
        %v634 = vunpack.c.l.b16 %v374
        %v635 = vunpack.c.l.b16 %v375
        %v636 = vunpack.c.l.b16 %v376
        %v637 = vunpack.c.l.b16 %v377
        %v638 = vunpack.c.l.b16 %v378
        %v639 = vunpack.c.l.b16 %v379
        %v640 = vunpack.c.l.b16 %v380
        %v641 = vunpack.c.l.b16 %v381
        %v642 = vunpack.c.l.b16 %v382
        %v643 = vunpack.c.l.b16 %v383
        %v644 = vunpack.c.l.b16 %v384
        %v645 = vunpack.c.l.b16 %v385
        %v646 = vunpack.c.l.b16 %v386
        %v647 = vunpack.c.l.b16 %v387
        %v648 = vunpack.c.l.b16 %v388
        %v649 = vunpack.c.l.b16 %v389
        %v650 = vunpack.c.l.b16 %v390
        %v651 = vunpack.c.l.b16 %v391
        %v652 = vunpack.c.l.b16 %v392
        %v653 = vunpack.c.l.b16 %v393
        %v654 = vunpack.c.l.b16 %v394
        %v655 = vunpack.c.l.b16 %v395
        %v656 = vunpack.c.l.b16 %v396
        %v657 = vunpack.c.l.b16 %v397
        %v658 = vunpack.c.l.b16 %v398
        %v659 = vunpack.c.l.b16 %v399
        %v660 = vunpack.c.l.b16 %v400
        %v661 = vunpack.c.l.b16 %v401
        %v662 = vunpack.c.l.b16 %v402
        %v663 = vunpack.c.l.b16 %v403
        %v664 = vunpack.c.l.b16 %v404
        %v665 = vunpack.c.l.b16 %v405
        %v666 = vunpack.c.l.b16 %v406
        %v667 = vunpack.c.l.b16 %v407
        %v668 = vunpack.c.l.b16 %v408
        %v669 = vunpack.c.l.b16 %v409
        %v670 = vunpack.c.l.b16 %v410
        %v671 = vunpack.c.l.b16 %v411
        %v672 = vunpack.c.l.b16 %v412
        %v673 = vunpack.c.l.b16 %v413
        %v674 = vunpack.c.l.b16 %v414
        %v675 = vunpack.c.l.b16 %v415
        %v676 = vunpack.c.l.b16 %v416
        %v677 = vpack.c.b16 %v550, %v549
        %v678 = vpack.c.b16 %v552, %v551
        %v679 = vpack.c.b16 %v554, %v553
        %v680 = vpack.c.b16 %v556, %v555
        %v681 = vpack.c.b16 %v558, %v557
        %v682 = vpack.c.b16 %v560, %v559
        %v683 = vpack.c.b16 %v562, %v561
        %v684 = vpack.c.b16 %v564, %v563
        %v685 = vpack.c.b16 %v566, %v565
        %v686 = vpack.c.b16 %v568, %v567
        %v687 = vpack.c.b16 %v570, %v569
        %v688 = vpack.c.b16 %v572, %v571
        %v689 = vpack.c.b16 %v574, %v573
        %v690 = vpack.c.b16 %v576, %v575
        %v691 = vpack.c.b16 %v578, %v577
        %v692 = vpack.c.b16 %v580, %v579
        %v693 = vpack.c.b16 %v582, %v581
        %v694 = vpack.c.b16 %v584, %v583
        %v695 = vpack.c.b16 %v586, %v585
        %v696 = vpack.c.b16 %v588, %v587
        %v697 = vpack.c.b16 %v590, %v589
        %v698 = vpack.c.b16 %v592, %v591
        %v699 = vpack.c.b16 %v594, %v593
        %v700 = vpack.c.b16 %v596, %v595
        %v701 = vpack.c.b16 %v598, %v597
        %v702 = vpack.c.b16 %v600, %v599
        %v703 = vpack.c.b16 %v602, %v601
        %v704 = vpack.c.b16 %v604, %v603
        %v705 = vpack.c.b16 %v606, %v605
        %v706 = vpack.c.b16 %v608, %v607
        %v707 = vpack.c.b16 %v610, %v609
        %v708 = vpack.c.b16 %v612, %v611
        %v709 = vpack.c.b16 %v614, %v613
        %v710 = vpack.c.b16 %v616, %v615
        %v711 = vpack.c.b16 %v618, %v617
        %v712 = vpack.c.b16 %v620, %v619
        %v713 = vpack.c.b16 %v622, %v621
        %v714 = vpack.c.b16 %v624, %v623
        %v715 = vpack.c.b16 %v626, %v625
        %v716 = vpack.c.b16 %v628, %v627
        %v717 = vpack.c.b16 %v630, %v629
        %v718 = vpack.c.b16 %v632, %v631
        %v719 = vpack.c.b16 %v634, %v633
        %v720 = vpack.c.b16 %v636, %v635
        %v721 = vpack.c.b16 %v638, %v637
        %v722 = vpack.c.b16 %v640, %v639
        %v723 = vpack.c.b16 %v642, %v641
        %v724 = vpack.c.b16 %v644, %v643
        %v725 = vpack.c.b16 %v646, %v645
        %v726 = vpack.c.b16 %v648, %v647
        %v727 = vpack.c.b16 %v650, %v649
        %v728 = vpack.c.b16 %v652, %v651
        %v729 = vpack.c.b16 %v654, %v653
        %v730 = vpack.c.b16 %v656, %v655
        %v731 = vpack.c.b16 %v658, %v657
        %v732 = vpack.c.b16 %v660, %v659
        %v733 = vpack.c.b16 %v662, %v661
        %v734 = vpack.c.b16 %v664, %v663
        %v735 = vpack.c.b16 %v666, %v665
        %v736 = vpack.c.b16 %v668, %v667
        %v737 = vpack.c.b16 %v670, %v669
        %v738 = vpack.c.b16 %v672, %v671
        %v739 = vpack.c.b16 %v674, %v673
        %v740 = vpack.c.b16 %v676, %v675
        %805 = vmatpush.bf16.msra.mxu0 %v684
        %806 = vmatpush.bf16.msra.mxu0 %v683
        %807 = vmatpush.bf16.msra.mxu0 %v682
        %808 = vmatpush.bf16.msra.mxu0 %v681
        %809 = vmatpush.bf16.msra.mxu0 %v680
        %810 = vmatpush.bf16.msra.mxu0 %v679
        %811 = vmatpush.bf16.msra.mxu0 %v678
        %812 = vmatpush.bf16.msra.mxu0 %v677
        %813 = vmatmul.bf16.gmra.mxu0 %v273
        %v814 = vpop.f32.mrf.mxu0
        %v815 = vadd.f32 %v419, %v814
        %v816 = vpop.f32.mrf.mxu0
        %v817 = vadd.f32 %v419, %v816
        %818 = vmatmul.bf16.gmra.mxu0 %v281
        %v819 = vpop.f32.mrf.mxu0
        %v820 = vadd.f32 %v419, %v819
        %v821 = vpop.f32.mrf.mxu0
        %822 = vdwg.mxu0
        %823 = vmatpush.bf16.msra.mxu0 %v692
        %824 = vmatpush.bf16.msra.mxu0 %v691
        %825 = vmatpush.bf16.msra.mxu0 %v690
        %826 = vmatpush.bf16.msra.mxu0 %v689
        %827 = vmatpush.bf16.msra.mxu0 %v688
        %828 = vmatpush.bf16.msra.mxu0 %v687
        %829 = vmatpush.bf16.msra.mxu0 %v686
        %830 = vmatpush.bf16.msra.mxu0 %v685
        %831 = vmatmul.bf16.gmra.mxu0 %v274
        %v832 = vpop.f32.mrf.mxu0
        %v833 = vadd.f32 %v815, %v832
        %v834 = vpop.f32.mrf.mxu0
        %v835 = vadd.f32 %v817, %v834
        %836 = vmatmul.bf16.gmra.mxu0 %v282
        %v837 = vpop.f32.mrf.mxu0
        %v838 = vadd.f32 %v820, %v837
        %v839 = vpop.f32.mrf.mxu0
        %840 = vdwg.mxu0
        %841 = vmatpush.bf16.msra.mxu0 %v700
        %842 = vmatpush.bf16.msra.mxu0 %v699
        %843 = vmatpush.bf16.msra.mxu0 %v698
        %844 = vmatpush.bf16.msra.mxu0 %v697
        %845 = vmatpush.bf16.msra.mxu0 %v696
        %846 = vmatpush.bf16.msra.mxu0 %v695
        %847 = vmatpush.bf16.msra.mxu0 %v694
        %848 = vmatpush.bf16.msra.mxu0 %v693
        %849 = vmatmul.bf16.gmra.mxu0 %v275
        %v850 = vpop.f32.mrf.mxu0
        %v851 = vadd.f32 %v833, %v850
        %v852 = vpop.f32.mrf.mxu0
        %v853 = vadd.f32 %v835, %v852
        %854 = vmatmul.bf16.gmra.mxu0 %v283
        %v855 = vpop.f32.mrf.mxu0
        %v856 = vadd.f32 %v838, %v855
        %v857 = vpop.f32.mrf.mxu0
        %858 = vdwg.mxu0
        %859 = vmatpush.bf16.msra.mxu0 %v708
        %860 = vmatpush.bf16.msra.mxu0 %v707
        %861 = vmatpush.bf16.msra.mxu0 %v706
        %862 = vmatpush.bf16.msra.mxu0 %v705
        %863 = vmatpush.bf16.msra.mxu0 %v704
        %864 = vmatpush.bf16.msra.mxu0 %v703
        %865 = vmatpush.bf16.msra.mxu0 %v702
        %866 = vmatpush.bf16.msra.mxu0 %v701
        %867 = vmatmul.bf16.gmra.mxu0 %v276
        %v868 = vpop.f32.mrf.mxu0
        %v869 = vadd.f32 %v851, %v868
        %v870 = vpop.f32.mrf.mxu0
        %v871 = vadd.f32 %v853, %v870
        %872 = vmatmul.bf16.gmra.mxu0 %v284
        %v873 = vpop.f32.mrf.mxu0
        %v874 = vadd.f32 %v856, %v873
        %v875 = vpop.f32.mrf.mxu0
        %876 = vdwg.mxu0
        %877 = vmatpush.bf16.msra.mxu0 %v716
        %878 = vmatpush.bf16.msra.mxu0 %v715
        %879 = vmatpush.bf16.msra.mxu0 %v714
        %880 = vmatpush.bf16.msra.mxu0 %v713
        %881 = vmatpush.bf16.msra.mxu0 %v712
        %882 = vmatpush.bf16.msra.mxu0 %v711
        %883 = vmatpush.bf16.msra.mxu0 %v710
        %884 = vmatpush.bf16.msra.mxu0 %v709
        %885 = vmatmul.bf16.gmra.mxu0 %v277
        %v886 = vpop.f32.mrf.mxu0
        %v887 = vadd.f32 %v869, %v886
        %v888 = vpop.f32.mrf.mxu0
        %v889 = vadd.f32 %v871, %v888
        %890 = vmatmul.bf16.gmra.mxu0 %v285
        %v891 = vpop.f32.mrf.mxu0
        %v892 = vadd.f32 %v874, %v891
        %v893 = vpop.f32.mrf.mxu0
        %894 = vdwg.mxu0
        %895 = vmatpush.bf16.msra.mxu0 %v724
        %896 = vmatpush.bf16.msra.mxu0 %v723
        %897 = vmatpush.bf16.msra.mxu0 %v722
        %898 = vmatpush.bf16.msra.mxu0 %v721
        %899 = vmatpush.bf16.msra.mxu0 %v720
        %900 = vmatpush.bf16.msra.mxu0 %v719
        %901 = vmatpush.bf16.msra.mxu0 %v718
        %902 = vmatpush.bf16.msra.mxu0 %v717
        %903 = vmatmul.bf16.gmra.mxu0 %v278
        %v904 = vpop.f32.mrf.mxu0
        %v905 = vadd.f32 %v887, %v904
        %v906 = vpop.f32.mrf.mxu0
        %v907 = vadd.f32 %v889, %v906
        %908 = vmatmul.bf16.gmra.mxu0 %v286
        %v909 = vpop.f32.mrf.mxu0
        %v910 = vadd.f32 %v892, %v909
        %v911 = vpop.f32.mrf.mxu0
        %912 = vdwg.mxu0
        %913 = vmatpush.bf16.msra.mxu0 %v732
        %914 = vmatpush.bf16.msra.mxu0 %v731
        %915 = vmatpush.bf16.msra.mxu0 %v730
        %916 = vmatpush.bf16.msra.mxu0 %v729
        %917 = vmatpush.bf16.msra.mxu0 %v728
        %918 = vmatpush.bf16.msra.mxu0 %v727
        %919 = vmatpush.bf16.msra.mxu0 %v726
        %920 = vmatpush.bf16.msra.mxu0 %v725
        %921 = vmatmul.bf16.gmra.mxu0 %v279
        %v922 = vpop.f32.mrf.mxu0
        %v923 = vadd.f32 %v905, %v922
        %v924 = vpop.f32.mrf.mxu0
        %v925 = vadd.f32 %v907, %v924
        %926 = vmatmul.bf16.gmra.mxu0 %v287
        %v927 = vpop.f32.mrf.mxu0
        %v928 = vadd.f32 %v910, %v927
        %v929 = vpop.f32.mrf.mxu0
        %930 = vdwg.mxu0
        %931 = vmatpush.bf16.msra.mxu0 %v740
        %932 = vmatpush.bf16.msra.mxu0 %v739
        %933 = vmatpush.bf16.msra.mxu0 %v738
        %934 = vmatpush.bf16.msra.mxu0 %v737
        %935 = vmatpush.bf16.msra.mxu0 %v736
        %936 = vmatpush.bf16.msra.mxu0 %v735
        %937 = vmatpush.bf16.msra.mxu0 %v734
        %938 = vmatpush.bf16.msra.mxu0 %v733
        %939 = vmatmul.bf16.gmra.mxu0 %v280
        %v940 = vpop.f32.mrf.mxu0
        %v941 = vadd.f32 %v923, %v940
        %v942 = vpop.f32.mrf.mxu0
        %v943 = vadd.f32 %v925, %v942
        %944 = vmatmul.bf16.gmra.mxu0 %v288
        %v945 = vpop.f32.mrf.mxu0
        %v946 = vadd.f32 %v928, %v945
        %v947 = vpop.f32.mrf.mxu0
        %948 = vdwg.mxu0
        %v949 = vpack.c.bf16 %v941, %v941
        %v950 = vpack.c.bf16 %v943, %v943
        %v951 = vpack.c.bf16 %v946, %v946
        %952 = vst [vmem:[%s239] sm:$0xf] %v949
        %953 = vst [vmem:[%s239 + $0x4] sm:$0xf] %v950
        %954 = vst [vmem:[%s239 + $0x8] sm:$0xf] %v951
        %v955 = vlaneseq
        %v956 = vshrl.u32 %v955, 7
        %p957 = scmp.ne.s32.totalorder %s26, 1
        // Predicated region
        $region41: #{tpu_custom_call.1} parent=31 // pred_check
          %p958 = pneg %p957
        $region42: #{tpu_custom_call.1} parent=31 // pred_check_branch
          %960 = sbr.rel (%p958) target = $region44
        $region43: #{tpu_custom_call.1} parent=31 // pred_region
          %v961 = vadd.f32 %v941, %v943
          %v962 = vadd.f32 %v961, %v946
          %v963 = vrot.slane %v962, 4
          %v964 = vadd.f32 %v962, %v963
          %v965 = vrot.slane %v964, 2
          %v966 = vadd.f32 %v964, %v965
          %v967 = vrot.slane %v966, 1
          %v968 = vadd.f32 %v966, %v967
          %v969 = vmul.f32 %v968, 0.041666668
          %v970 = vsub.f32 %v941, %v969
          %v971 = vsub.f32 %v943, %v969
          %v972 = vsub.f32 %v946, %v969
          %v973 = vmul.f32 %v970, %v970
          %v974 = vmul.f32 %v971, %v971
          %v975 = vmul.f32 %v972, %v972
          %v976 = vadd.f32 %v973, %v974
          %v977 = vadd.f32 %v976, %v975
          %v978 = vrot.slane %v977, 4
          %v979 = vadd.f32 %v977, %v978
          %v980 = vrot.slane %v979, 2
          %v981 = vadd.f32 %v979, %v980
          %v982 = vrot.slane %v981, 1
          %v983 = vadd.f32 %v981, %v982
          %vm984 = vcmp.eq.s32.totalorder %v956, 0
          %vm985 = vcmp.eq.s32.totalorder %v956, 1
          %v986 = vsel %vm985, %v983, 0.0
          %v987 = vsel %vm984, %v968, %v986
          %988 = vst [vmem:[%s246] sm:$0xff] %v987
        $region44: #{tpu_custom_call.1} parent=31 // pred_fallthru
          _
        %p989 = scmp.eq.s32.totalorder %s26, 1
        // Predicated region
        $region45: #{tpu_custom_call.1} parent=31 // pred_check
          %p990 = pneg %p989
        $region46: #{tpu_custom_call.1} parent=31 // pred_check_branch
          %992 = sbr.rel (%p990) target = $region48
        $region47: #{tpu_custom_call.1} parent=31 // pred_region
          %v993 = vadd.s32 %v956, 8
          %v994 = vadd.s32 %v956, 16
          %vm995 = vcmp.lt.s32.totalorder %v956, 12
          %vm996 = vcmp.lt.s32.totalorder %v993, 12
          %vm997 = vcmp.lt.s32.totalorder %v994, 12
          %v998 = vsel %vm995, %v941, 0.0
          %v999 = vsel %vm996, %v943, 0.0
          %v1000 = vsel %vm997, %v946, 0.0
          %v1001 = vadd.f32 %v998, %v999
          %v1002 = vadd.f32 %v1001, %v1000
          %v1003 = vrot.slane %v1002, 4
          %v1004 = vadd.f32 %v1002, %v1003
          %v1005 = vrot.slane %v1004, 2
          %v1006 = vadd.f32 %v1004, %v1005
          %v1007 = vrot.slane %v1006, 1
          %v1008 = vadd.f32 %v1006, %v1007
          %v1009 = vmul.f32 %v1008, 0.083333336
          %v1010 = vsub.f32 %v998, %v1009
          %v1011 = vsub.f32 %v999, %v1009
          %v1012 = vsub.f32 %v1000, %v1009
          %v1013 = vsel %vm995, %v1010, 0.0
          %v1014 = vsel %vm996, %v1011, 0.0
          %v1015 = vsel %vm997, %v1012, 0.0
          %v1016 = vmul.f32 %v1013, %v1013
          %v1017 = vmul.f32 %v1014, %v1014
          %v1018 = vmul.f32 %v1015, %v1015
          %v1019 = vadd.f32 %v1016, %v1017
          %v1020 = vadd.f32 %v1019, %v1018
          %v1021 = vrot.slane %v1020, 4
          %v1022 = vadd.f32 %v1020, %v1021
          %v1023 = vrot.slane %v1022, 2
          %v1024 = vadd.f32 %v1022, %v1023
          %v1025 = vrot.slane %v1024, 1
          %v1026 = vadd.f32 %v1024, %v1025
          %vm1027 = vcmp.eq.s32.totalorder %v956, 0
          %vm1028 = vcmp.eq.s32.totalorder %v956, 1
          %v1029 = vsel %vm1028, %v1026, 0.0
          %v1030 = vsel %vm1027, %v1008, %v1029
          %1031 = vst [vmem:[%s246] sm:$0xff] %v1030
        $region48: #{tpu_custom_call.1} parent=31 // pred_fallthru
          _
        %s1032 = sand.u32 %s102, 1
        %s1033 = scalar_lea.sflag [#allocation4], %s1032
        %s1034 = sand.u32 %s102, 1
        %s1035 = smul.addr %s1034, 12
        %s1036 = scalar_lea.vmem [#allocation7], %s1035
        %s1037 = sand.u32 %s128, 1
        %s1038 = scalar_lea.sflag [#allocation9], %s1037
        %s1039 = sand.u32 %s128, 1
        %s1040 = smul.addr %s1039, 8
        %s1041 = scalar_lea.vmem [#allocation8], %s1040
        // Predicated region
        $region49: #{tpu_custom_call.1} parent=31 // pred_check
          %p1042 = pneg %p112
        $region50: #{tpu_custom_call.1} parent=31 // pred_check_branch
          %1044 = sbr.rel (%p1042) target = $region52
        $region51: #{tpu_custom_call.1} parent=31 // pred_region
          %s1045 = smul.u32 3, %s26
          %1047 = vsyncadd %s1033, 0
          %s1048 = smul.addr %s1045, 4
          %s1049 = scalar_lea.hbm %s3, %s1048
          %s1050 = sshll.u32 %s1036, 4
          %s1051 = int_to_ptr.vmem [resolvable:$true] %s1050
          %s1052 = sshll.u32 %s1049, 4
          %s1053 = int_to_ptr.hbm [resolvable:$true] %s1052
          %1058 = dma.vmem_to_hbm [thread:$0]  %s1051, 192, %s1053, %s1033, 64, 64, 4
        $region52: #{tpu_custom_call.1} parent=31 // pred_fallthru
          _
        // Predicated region
        $region53: #{tpu_custom_call.1} parent=31 // pred_check
          %p1059 = pneg %p138
        $region54: #{tpu_custom_call.1} parent=31 // pred_check_branch
          %1061 = sbr.rel (%p1059) target = $region56
        $region55: #{tpu_custom_call.1} parent=31 // pred_region
          %1063 = vsyncadd %s1038, 0
          %s1064 = smul.addr %s26, 8
          %s1065 = scalar_lea.hbm %s4, %s1064
          %s1067 = sshll.u32 %s1041, 4
          %s1068 = int_to_ptr.vmem [resolvable:$true] %s1067
          %s1069 = sshll.u32 %s1065, 4
          %s1070 = int_to_ptr.hbm [resolvable:$true] %s1069
          %1072 = dma.vmem_to_hbm [thread:$0]  %s1068, 128, %s1070, %s1038
        $region56: #{tpu_custom_call.1} parent=31 // pred_fallthru
          _
      $region32: #{tpu_custom_call.1} parent=5 // pred_fallthru
        _
      %p1073 = scmp.le.s32.totalorder 2, %s21
      // Predicated region
      $region57: #{tpu_custom_call.1} parent=5 // pred_check
        %p1074 = pneg %p1073
      $region58: #{tpu_custom_call.1} parent=5 // pred_check_branch
        %1076 = sbr.rel (%p1074) target = $region60
      $region59: #{tpu_custom_call.1} parent=5 // pred_region
        %s1077 = ssub.s32 %s21, 2
        // Predicated region
        $region61: #{tpu_custom_call.1} parent=59 // pred_check
          %p1078 = pneg %p118
        $region62: #{tpu_custom_call.1} parent=59 // pred_check_branch
          %1080 = sbr.rel (%p1078) target = $region64
        $region63: #{tpu_custom_call.1} parent=59 // pred_region
          %s1081 = sand.u32 %s103, 1
          %s1082 = scalar_lea.sflag [#allocation4], %s1081
          %s1083 = sand.u32 %s103, 1
          %s1084 = smul.addr %s1083, 12
          %s1085 = scalar_lea.vmem [#allocation7], %s1084
          %1087 = dma.done %s1082, 192
        $region64: #{tpu_custom_call.1} parent=59 // pred_fallthru
          _
        // Predicated region
        $region65: #{tpu_custom_call.1} parent=59 // pred_check
          %p1088 = pneg %p144
        $region66: #{tpu_custom_call.1} parent=59 // pred_check_branch
          %1090 = sbr.rel (%p1088) target = $region68
        $region67: #{tpu_custom_call.1} parent=59 // pred_region
          %s1091 = sand.u32 %s129, 1
          %s1092 = scalar_lea.sflag [#allocation9], %s1091
          %s1093 = sand.u32 %s129, 1
          %s1094 = smul.addr %s1093, 8
          %s1095 = scalar_lea.vmem [#allocation8], %s1094
          %1097 = dma.done %s1092, 128
        $region68: #{tpu_custom_call.1} parent=59 // pred_fallthru
          _
      $region60: #{tpu_custom_call.1} parent=5 // pred_fallthru
        _
    $region6: #{tpu_custom_call.1} parent=1 // loop_footer
      %s25 = sadd.s32 1, %s21
    $region7: #{tpu_custom_call.1} parent=1 // loop_footer_branch
      %20 = sbr.rel target = $region3
    $region8: #{tpu_custom_call.1} parent=1 // loop_exit
      _
    %1098 = vsyncpa [#allocation3], 1
    %s1099 = scalar_lea.sflag [#allocation3], 1
    %1100 = vsyncpa %s1099, 1
    %1101 = vsyncpa [#allocation6], 1
    %1102 = vsyncpa [#allocation4], 1
    %s1103 = scalar_lea.sflag [#allocation4], 1
    %1104 = vsyncpa %s1103, 1
    %1105 = vsyncpa [#allocation9], 1
    %s1106 = scalar_lea.sflag [#allocation9], 1
    %1107 = vsyncpa %s1106, 1

</llo_original>
